<compile_context>
chip_gen: v7x
topology: tpu7x:2x2x1
jax: 0.10.0
libtpu: 0.0.40
codegen_flags: <defaults>
</compile_context>

<pallas_src>
import functools

import jax
import jax.numpy as jnp
from jax.experimental import pallas as pl
from jax.experimental.pallas import tpu as pltpu

LANE = 128
SUBLANE = 8


def _round_up(x, m):
    return (x + m - 1) // m * m


def _fused_heads_kernel(dx_ref, rx_ref,
                        w1dx_ref, b1dx_ref, w1rx_ref, b1rx_ref,
                        w20_ref, w21_ref, w22_ref, w23_ref, b2_ref,
                        out_ref, *, hp):
    """All four ClsHeads fused over one batch tile.

    Layer 1: one fused matmul per input covering that input's two heads
             (dx -> heads 0,2 ; rx -> heads 1,3), columns [0:hp) / [hp:2hp).
    Layer 2: four dense matmuls off slices of the fused hidden, concatenated
             into one lane-dense (multiple-of-128 wide) output slab.
    """
    h_dx = jnp.dot(dx_ref[...], w1dx_ref[...],
                   preferred_element_type=jnp.float32) + b1dx_ref[...]
    h_rx = jnp.dot(rx_ref[...], w1rx_ref[...],
                   preferred_element_type=jnp.float32) + b1rx_ref[...]
    # Cast the f32 hidden to the weight dtype for the second MXU op
    # (no-op for f32 weights; one extra rounding if weights are bf16).
    h_dx = jnp.maximum(h_dx, 0.0).astype(w20_ref.dtype)
    h_rx = jnp.maximum(h_rx, 0.0).astype(w20_ref.dtype)

    y0 = jnp.dot(h_dx[:, :hp], w20_ref[...], preferred_element_type=jnp.float32)
    y1 = jnp.dot(h_rx[:, :hp], w21_ref[...], preferred_element_type=jnp.float32)
    y2 = jnp.dot(h_dx[:, hp:], w22_ref[...], preferred_element_type=jnp.float32)
    y3 = jnp.dot(h_rx[:, hp:], w23_ref[...], preferred_element_type=jnp.float32)

    y = jnp.concatenate([y0, y1, y2, y3], axis=-1) + b2_ref[...]
    out_ref[...] = y.astype(out_ref.dtype)


def pack_self_supervised_head_params(params, hidden, dx_voc_size, rx_voc_size):
    """Zero-pad and fuse the four heads' parameters into the kernel layout.

    Done once (outside the forward) so padding/concat cost is not paid per call.
    """
    hp = _round_up(hidden, LANE)
    dxvp = _round_up(dx_voc_size, LANE)
    rxvp = _round_up(rx_voc_size, LANE)

    def pad2(a, r, c):
        return jnp.pad(a, ((0, r - a.shape[0]), (0, c - a.shape[1])))

    def pad1(a, c):
        return jnp.pad(a, ((0, c - a.shape[0]),))

    p0, p1, p2, p3 = params  # heads 0,2 consume dx; heads 1,3 consume rx
    packed = {
        "w1_dx": jnp.concatenate(
            [pad2(p0["w1"], hp, hp), pad2(p2["w1"], hp, hp)], axis=1),
        "b1_dx": jnp.concatenate(
            [pad1(p0["b1"], hp), pad1(p2["b1"], hp)]).reshape(1, 2 * hp),
        "w1_rx": jnp.concatenate(
            [pad2(p1["w1"], hp, hp), pad2(p3["w1"], hp, hp)], axis=1),
        "b1_rx": jnp.concatenate(
            [pad1(p1["b1"], hp), pad1(p3["b1"], hp)]).reshape(1, 2 * hp),
        "w2_0": pad2(p0["w2"], hp, dxvp),
        "w2_1": pad2(p1["w2"], hp, dxvp),
        "w2_2": pad2(p2["w2"], hp, rxvp),
        "w2_3": pad2(p3["w2"], hp, rxvp),
        "b2": jnp.concatenate(
            [pad1(p0["b2"], dxvp), pad1(p1["b2"], dxvp),
             pad1(p2["b2"], rxvp), pad1(p3["b2"], rxvp)]
        ).reshape(1, 2 * (dxvp + rxvp)),
    }
    meta = dict(hidden=hidden, hp=hp, dx_voc=dx_voc_size, rx_voc=rx_voc_size,
                dxvp=dxvp, rxvp=rxvp)
    return packed, meta


def self_supervised_head_forward(packed, meta, dx_inputs, rx_inputs):
    """Matches SelfSupervisedHead.forward: (cls0(dx), cls1(rx), cls2(dx), cls3(rx))."""
    B, H = dx_inputs.shape
    assert rx_inputs.shape == (B, H) and H == meta["hidden"]
    hp, dxvp, rxvp = meta["hp"], meta["dxvp"], meta["rxvp"]
    vp_total = 2 * (dxvp + rxvp)
    dtype = dx_inputs.dtype
    itemsize = jnp.dtype(dtype).itemsize

    # Batch tile: multiple of 8 sublanes, capped at 256 rows so the working set
    # (x tiles + weights + out tile, x2 for double-buffering) stays well inside
    # the v7x 64 MiB VMEM / default scoped VMEM even at production vocab sizes.
    # TODO(synk): for BERT-scale vocab (V ~ 30k) additionally tile the vocab
    # axis (tn=256 on v6e/v7x, 128 on v5e) and stream W2 column tiles.
    bt = min(_round_up(B, SUBLANE), 256)
    b_pad = _round_up(B, bt)
    grid = (b_pad // bt,)

    dx_p = jnp.pad(dx_inputs, ((0, b_pad - B), (0, hp - H)))
    rx_p = jnp.pad(rx_inputs, ((0, b_pad - B), (0, hp - H)))

    flops = 2 * (2 * b_pad * hp * (2 * hp)) + 2 * b_pad * hp * vp_total
    bytes_accessed = int(
        sum(int(v.size) * jnp.dtype(v.dtype).itemsize for v in packed.values())
        + (int(dx_p.size) + int(rx_p.size)) * itemsize
        + b_pad * vp_total * itemsize)
    cost = pl.CostEstimate(flops=flops, transcendentals=0,
                           bytes_accessed=bytes_accessed)

    batch_spec = pl.BlockSpec((bt, hp), lambda i: (i, 0))

    def resident(shape):
        # Whole array, same block every grid step -> stays VMEM-resident.
        return pl.BlockSpec(shape, lambda i: (0, 0))

    out = pl.pallas_call(
        functools.partial(_fused_heads_kernel, hp=hp),
        out_shape=jax.ShapeDtypeStruct((b_pad, vp_total), dtype),
        grid_spec=pltpu.PrefetchScalarGridSpec(
            num_scalar_prefetch=0,
            grid=grid,
            in_specs=[
                batch_spec, batch_spec,
                resident((hp, 2 * hp)), resident((1, 2 * hp)),
                resident((hp, 2 * hp)), resident((1, 2 * hp)),
                resident((hp, dxvp)), resident((hp, dxvp)),
                resident((hp, rxvp)), resident((hp, rxvp)),
                resident((1, vp_total)),
            ],
            out_specs=pl.BlockSpec((bt, vp_total), lambda i: (i, 0)),
        ),
        compiler_params=pltpu.CompilerParams(
            dimension_semantics=("parallel",)),
        cost_estimate=cost,
    )(dx_p, rx_p,
      packed["w1_dx"], packed["b1_dx"], packed["w1_rx"], packed["b1_rx"],
      packed["w2_0"], packed["w2_1"], packed["w2_2"], packed["w2_3"],
      packed["b2"])

    dx_voc, rx_voc = meta["dx_voc"], meta["rx_voc"]
    o0 = out[:B, 0:dx_voc]
    o1 = out[:B, dxvp:dxvp + dx_voc]
    o2 = out[:B, 2 * dxvp:2 * dxvp + rx_voc]
    o3 = out[:B, 2 * dxvp + rxvp:2 * dxvp + rxvp + rx_voc]
    return o0, o1, o2, o3


# ----------------------- parameter init (PyTorch-equivalent layout) ---------

def init_cls_head_params(key, hidden, voc_size, dtype=jnp.float32):
    k1, k2, k3, k4 = jax.random.split(key, 4)
    scale = 1.0 / jnp.sqrt(hidden)
    return {
        "w1": jax.random.normal(k1, (hidden, hidden), dtype) * scale,
        "b1": jax.random.normal(k2, (hidden,), dtype) * scale,
        "w2": jax.random.normal(k3, (hidden, voc_size), dtype) * scale,
        "b2": jax.random.normal(k4, (voc_size,), dtype) * scale,
    }


def init_self_supervised_head(key, hidden, dx_voc_size, rx_voc_size,
                              dtype=jnp.float32):
    keys = jax.random.split(key, 4)
    voc_sizes = (dx_voc_size, dx_voc_size, rx_voc_size, rx_voc_size)
    return [init_cls_head_params(k, hidden, v, dtype)
            for k, v in zip(keys, voc_sizes)]


def _reference_forward(params, dx_inputs, rx_inputs):
    def head(p, x):
        h = jnp.maximum(x @ p["w1"] + p["b1"], 0.0)
        return h @ p["w2"] + p["b2"]
    return (head(params[0], dx_inputs), head(params[1], rx_inputs),
            head(params[2], dx_inputs), head(params[3], rx_inputs))


if __name__ == "__main__":
    key = jax.random.PRNGKey(0)
    k_params, k_dx, k_rx = jax.random.split(key, 3)

    batch = 8
    hidden = 32          # config.code_hidden_size
    dx_voc_size = 16
    rx_voc_size = 24

    params = init_self_supervised_head(k_params, hidden, dx_voc_size, rx_voc_size)
    packed, meta = pack_self_supervised_head_params(
        params, hidden, dx_voc_size, rx_voc_size)

    dx_inputs = jax.random.normal(k_dx, (batch, hidden), jnp.float32)
    rx_inputs = jax.random.normal(k_rx, (batch, hidden), jnp.float32)

    outs = self_supervised_head_forward(packed, meta, dx_inputs, rx_inputs)
    outs = jax.block_until_ready(outs)

    # sanity check against a plain-JAX reference
    refs = _reference_forward(params, dx_inputs, rx_inputs)
    for o, r in zip(outs, refs):
        assert o.shape == r.shape
        assert bool(jnp.allclose(o, r, atol=1e-4, rtol=1e-4))

    assert outs[0].shape == (batch, dx_voc_size)
    assert outs[1].shape == (batch, dx_voc_size)
    assert outs[2].shape == (batch, rx_voc_size)
    assert outs[3].shape == (batch, rx_voc_size)

    print("KERNEL_OK")
</pallas_src>

<mosaic_0001>
module attributes {stable_mosaic.version = 11 : i64} {
  func.func @_fused_heads_kernel(%arg0: i32, %arg1: memref<8x128xf32, #tpu.memory_space<vmem>>, %arg2: memref<8x128xf32, #tpu.memory_space<vmem>>, %arg3: memref<128x256xf32, #tpu.memory_space<vmem>>, %arg4: memref<1x256xf32, #tpu.memory_space<vmem>>, %arg5: memref<128x256xf32, #tpu.memory_space<vmem>>, %arg6: memref<1x256xf32, #tpu.memory_space<vmem>>, %arg7: memref<128x128xf32, #tpu.memory_space<vmem>>, %arg8: memref<128x128xf32, #tpu.memory_space<vmem>>, %arg9: memref<128x128xf32, #tpu.memory_space<vmem>>, %arg10: memref<128x128xf32, #tpu.memory_space<vmem>>, %arg11: memref<1x512xf32, #tpu.memory_space<vmem>>, %arg12: memref<8x512xf32, #tpu.memory_space<vmem>>) attributes {dimension_semantics = [#tpu.dimension_semantics<parallel>], iteration_bounds = array<i64: 1>, scalar_prefetch = 0 : i64, scratch_operands = 0 : i64, tpu.core_type = #tpu.core_type<tc>, window_params = [{transform_indices = @transform_0, window_bounds = array<i64: 8, 128>}, {transform_indices = @transform_1, window_bounds = array<i64: 8, 128>}, {pipeline_mode = #tpu.pipeline_mode<synchronous>, transform_indices = @transform_2, window_bounds = array<i64: 128, 256>}, {pipeline_mode = #tpu.pipeline_mode<synchronous>, transform_indices = @transform_3, window_bounds = array<i64: 1, 256>}, {pipeline_mode = #tpu.pipeline_mode<synchronous>, transform_indices = @transform_4, window_bounds = array<i64: 128, 256>}, {pipeline_mode = #tpu.pipeline_mode<synchronous>, transform_indices = @transform_5, window_bounds = array<i64: 1, 256>}, {pipeline_mode = #tpu.pipeline_mode<synchronous>, transform_indices = @transform_6, window_bounds = array<i64: 128, 128>}, {pipeline_mode = #tpu.pipeline_mode<synchronous>, transform_indices = @transform_7, window_bounds = array<i64: 128, 128>}, {pipeline_mode = #tpu.pipeline_mode<synchronous>, transform_indices = @transform_8, window_bounds = array<i64: 128, 128>}, {pipeline_mode = #tpu.pipeline_mode<synchronous>, transform_indices = @transform_9, window_bounds = array<i64: 128, 128>}, {pipeline_mode = #tpu.pipeline_mode<synchronous>, transform_indices = @transform_10, window_bounds = array<i64: 1, 512>}, {transform_indices = @transform_11, window_bounds = array<i64: 8, 512>}]} {
    %c0 = arith.constant 0 : index
    %c0_0 = arith.constant 0 : index
    %0 = vector.load %arg1[%c0, %c0_0] : memref<8x128xf32, #tpu.memory_space<vmem>>, vector<8x128xf32>
    %c0_1 = arith.constant 0 : index
    %c0_2 = arith.constant 0 : index
    %1 = vector.load %arg3[%c0_1, %c0_2] : memref<128x256xf32, #tpu.memory_space<vmem>>, vector<128x256xf32>
    %cst = arith.constant dense<0.000000e+00> : vector<8x256xf32>
    %2 = tpu.matmul %0, %1, %cst {dimension_numbers = #tpu.dot_dimension_numbers<[1], [0], [0], [1], [0, 0, 1, 1], [], []>} : vector<8x128xf32>, vector<128x256xf32>, vector<8x256xf32> -> vector<8x256xf32>
    %c0_3 = arith.constant 0 : index
    %c0_4 = arith.constant 0 : index
    %3 = vector.load %arg4[%c0_3, %c0_4] : memref<1x256xf32, #tpu.memory_space<vmem>>, vector<1x256xf32>
    %4 = vector.broadcast %3 : vector<1x256xf32> to vector<8x256xf32>
    %5 = arith.addf %2, %4 : vector<8x256xf32>
    %c0_5 = arith.constant 0 : index
    %c0_6 = arith.constant 0 : index
    %6 = vector.load %arg2[%c0_5, %c0_6] : memref<8x128xf32, #tpu.memory_space<vmem>>, vector<8x128xf32>
    %c0_7 = arith.constant 0 : index
    %c0_8 = arith.constant 0 : index
    %7 = vector.load %arg5[%c0_7, %c0_8] : memref<128x256xf32, #tpu.memory_space<vmem>>, vector<128x256xf32>
    %cst_9 = arith.constant dense<0.000000e+00> : vector<8x256xf32>
    %8 = tpu.matmul %6, %7, %cst_9 {dimension_numbers = #tpu.dot_dimension_numbers<[1], [0], [0], [1], [0, 0, 1, 1], [], []>} : vector<8x128xf32>, vector<128x256xf32>, vector<8x256xf32> -> vector<8x256xf32>
    %c0_10 = arith.constant 0 : index
    %c0_11 = arith.constant 0 : index
    %9 = vector.load %arg6[%c0_10, %c0_11] : memref<1x256xf32, #tpu.memory_space<vmem>>, vector<1x256xf32>
    %10 = vector.broadcast %9 : vector<1x256xf32> to vector<8x256xf32>
    %11 = arith.addf %8, %10 : vector<8x256xf32>
    %cst_12 = arith.constant 0.000000e+00 : f32
    %12 = vector.broadcast %cst_12 : f32 to vector<8x256xf32>
    %13 = arith.maximumf %5, %12 : vector<8x256xf32>
    %cst_13 = arith.constant 0.000000e+00 : f32
    %14 = vector.broadcast %cst_13 : f32 to vector<8x256xf32>
    %15 = arith.maximumf %11, %14 : vector<8x256xf32>
    %16 = vector.extract_strided_slice %13 {offsets = [0, 0], sizes = [8, 128], strides = [1, 1]} : vector<8x256xf32> to vector<8x128xf32>
    %c0_14 = arith.constant 0 : index
    %c0_15 = arith.constant 0 : index
    %17 = vector.load %arg7[%c0_14, %c0_15] : memref<128x128xf32, #tpu.memory_space<vmem>>, vector<128x128xf32>
    %cst_16 = arith.constant dense<0.000000e+00> : vector<8x128xf32>
    %18 = tpu.matmul %16, %17, %cst_16 {dimension_numbers = #tpu.dot_dimension_numbers<[1], [0], [0], [1], [0, 0, 1, 1], [], []>} : vector<8x128xf32>, vector<128x128xf32>, vector<8x128xf32> -> vector<8x128xf32>
    %19 = vector.extract_strided_slice %15 {offsets = [0, 0], sizes = [8, 128], strides = [1, 1]} : vector<8x256xf32> to vector<8x128xf32>
    %c0_17 = arith.constant 0 : index
    %c0_18 = arith.constant 0 : index
    %20 = vector.load %arg8[%c0_17, %c0_18] : memref<128x128xf32, #tpu.memory_space<vmem>>, vector<128x128xf32>
    %cst_19 = arith.constant dense<0.000000e+00> : vector<8x128xf32>
    %21 = tpu.matmul %19, %20, %cst_19 {dimension_numbers = #tpu.dot_dimension_numbers<[1], [0], [0], [1], [0, 0, 1, 1], [], []>} : vector<8x128xf32>, vector<128x128xf32>, vector<8x128xf32> -> vector<8x128xf32>
    %22 = vector.extract_strided_slice %13 {offsets = [0, 128], sizes = [8, 128], strides = [1, 1]} : vector<8x256xf32> to vector<8x128xf32>
    %c0_20 = arith.constant 0 : index
    %c0_21 = arith.constant 0 : index
    %23 = vector.load %arg9[%c0_20, %c0_21] : memref<128x128xf32, #tpu.memory_space<vmem>>, vector<128x128xf32>
    %cst_22 = arith.constant dense<0.000000e+00> : vector<8x128xf32>
    %24 = tpu.matmul %22, %23, %cst_22 {dimension_numbers = #tpu.dot_dimension_numbers<[1], [0], [0], [1], [0, 0, 1, 1], [], []>} : vector<8x128xf32>, vector<128x128xf32>, vector<8x128xf32> -> vector<8x128xf32>
    %25 = vector.extract_strided_slice %15 {offsets = [0, 128], sizes = [8, 128], strides = [1, 1]} : vector<8x256xf32> to vector<8x128xf32>
    %c0_23 = arith.constant 0 : index
    %c0_24 = arith.constant 0 : index
    %26 = vector.load %arg10[%c0_23, %c0_24] : memref<128x128xf32, #tpu.memory_space<vmem>>, vector<128x128xf32>
    %cst_25 = arith.constant dense<0.000000e+00> : vector<8x128xf32>
    %27 = tpu.matmul %25, %26, %cst_25 {dimension_numbers = #tpu.dot_dimension_numbers<[1], [0], [0], [1], [0, 0, 1, 1], [], []>} : vector<8x128xf32>, vector<128x128xf32>, vector<8x128xf32> -> vector<8x128xf32>
    %28 = tpu.concatenate %18, %21, %24, %27 in 1 : vector<8x128xf32>, vector<8x128xf32>, vector<8x128xf32>, vector<8x128xf32> -> vector<8x512xf32>
    %c0_26 = arith.constant 0 : index
    %c0_27 = arith.constant 0 : index
    %29 = vector.load %arg11[%c0_26, %c0_27] : memref<1x512xf32, #tpu.memory_space<vmem>>, vector<1x512xf32>
    %30 = vector.broadcast %29 : vector<1x512xf32> to vector<8x512xf32>
    %31 = arith.addf %28, %30 : vector<8x512xf32>
    %c0_28 = arith.constant 0 : index
    %c0_29 = arith.constant 0 : index
    %32 = vector.load %arg12[%c0_28, %c0_29] : memref<8x512xf32, #tpu.memory_space<vmem>>, vector<8x512xf32>
    tpu.vector_store %arg12[%c0_28, %c0_29], %31 {strides = array<i32>} : memref<8x512xf32, #tpu.memory_space<vmem>>, vector<8x512xf32>,
    return
  }
  func.func @transform_0(%arg0: i32) -> (i32, i32) {
    %c0_i32 = arith.constant 0 : i32
    %c0_i32_0 = arith.constant 0 : i32
    return %arg0, %c0_i32 : i32, i32
  }
  func.func @transform_1(%arg0: i32) -> (i32, i32) {
    %c0_i32 = arith.constant 0 : i32
    %c0_i32_0 = arith.constant 0 : i32
    return %arg0, %c0_i32 : i32, i32
  }
  func.func @transform_2(%arg0: i32) -> (i32, i32) {
    %c0_i32 = arith.constant 0 : i32
    %c0_i32_0 = arith.constant 0 : i32
    %c0_i32_1 = arith.constant 0 : i32
    return %c0_i32, %c0_i32_0 : i32, i32
  }
  func.func @transform_3(%arg0: i32) -> (i32, i32) {
    %c0_i32 = arith.constant 0 : i32
    %c0_i32_0 = arith.constant 0 : i32
    %c0_i32_1 = arith.constant 0 : i32
    return %c0_i32, %c0_i32_0 : i32, i32
  }
  func.func @transform_4(%arg0: i32) -> (i32, i32) {
    %c0_i32 = arith.constant 0 : i32
    %c0_i32_0 = arith.constant 0 : i32
    %c0_i32_1 = arith.constant 0 : i32
    return %c0_i32, %c0_i32_0 : i32, i32
  }
  func.func @transform_5(%arg0: i32) -> (i32, i32) {
    %c0_i32 = arith.constant 0 : i32
    %c0_i32_0 = arith.constant 0 : i32
    %c0_i32_1 = arith.constant 0 : i32
    return %c0_i32, %c0_i32_0 : i32, i32
  }
  func.func @transform_6(%arg0: i32) -> (i32, i32) {
    %c0_i32 = arith.constant 0 : i32
    %c0_i32_0 = arith.constant 0 : i32
    %c0_i32_1 = arith.constant 0 : i32
    return %c0_i32, %c0_i32_0 : i32, i32
  }
  func.func @transform_7(%arg0: i32) -> (i32, i32) {
    %c0_i32 = arith.constant 0 : i32
    %c0_i32_0 = arith.constant 0 : i32
    %c0_i32_1 = arith.constant 0 : i32
    return %c0_i32, %c0_i32_0 : i32, i32
  }
  func.func @transform_8(%arg0: i32) -> (i32, i32) {
    %c0_i32 = arith.constant 0 : i32
    %c0_i32_0 = arith.constant 0 : i32
    %c0_i32_1 = arith.constant 0 : i32
    return %c0_i32, %c0_i32_0 : i32, i32
  }
  func.func @transform_9(%arg0: i32) -> (i32, i32) {
    %c0_i32 = arith.constant 0 : i32
    %c0_i32_0 = arith.constant 0 : i32
    %c0_i32_1 = arith.constant 0 : i32
    return %c0_i32, %c0_i32_0 : i32, i32
  }
  func.func @transform_10(%arg0: i32) -> (i32, i32) {
    %c0_i32 = arith.constant 0 : i32
    %c0_i32_0 = arith.constant 0 : i32
    %c0_i32_1 = arith.constant 0 : i32
    return %c0_i32, %c0_i32_0 : i32, i32
  }
  func.func @transform_11(%arg0: i32) -> (i32, i32) {
    %c0_i32 = arith.constant 0 : i32
    %c0_i32_0 = arith.constant 0 : i32
    return %arg0, %c0_i32 : i32, i32
  }
}

</mosaic_0001>

<llo_original>
// kernel: tpu_custom_call.1
$region0: #{tpu_custom_call.1}
  #allocation0 [shape = 'u32[]', space=smem, size = 0x4, offset = 0x4, fixed_abs, tag = 'smem constant byte address 0x4 - core index']
  #allocation1 [shape = 'u32[144,128]{1,0:T(1,128)}', space=vmem, size = 0x12000, scoped, tag = 'internal scratch']
  %s0 = inlined_call_operand.hbm [shape: f32[8,128], index: 0, kind: input, shape index: {}]
  %s1 = inlined_call_operand.hbm [shape: f32[8,128], index: 1, kind: input, shape index: {}]
  %s2 = inlined_call_operand.hbm [shape: f32[128,256], index: 2, kind: input, shape index: {}]
  %s3 = inlined_call_operand.vmem [shape: f32[1,256], index: 3, kind: input, shape index: {}]
  %s4 = inlined_call_operand.hbm [shape: f32[128,256], index: 4, kind: input, shape index: {}]
  %s5 = inlined_call_operand.vmem [shape: f32[1,256], index: 5, kind: input, shape index: {}]
  %s6 = inlined_call_operand.hbm [shape: f32[128,128], index: 6, kind: input, shape index: {}]
  %s7 = inlined_call_operand.hbm [shape: f32[128,128], index: 7, kind: input, shape index: {}]
  %s8 = inlined_call_operand.hbm [shape: f32[128,128], index: 8, kind: input, shape index: {}]
  %s9 = inlined_call_operand.hbm [shape: f32[128,128], index: 9, kind: input, shape index: {}]
  %s10 = inlined_call_operand.vmem [shape: f32[1,512], index: 10, kind: input, shape index: {}]
  %s11 = inlined_call_operand.hbm [shape: f32[8,512], index: 11, kind: output, shape index: {}]
  %s12 = sld [smem:[#allocation0]]
  $region86: #{tpu_custom_call.1} parent=0
    _
  %s14 = ssub.s32 1, %s12
  %s15 = scalar_select 0, %s14, %s12
  $region1: #{tpu_custom_call.1} parent=0
    #allocation2 [shape = 'u8[4096]{0}', space=vmem, size = 0x1000, scoped, tag = 'input window, operand 0, single buffered']
    #allocation3 [shape = 's32[1]{0}', space=sflag, size = 0x4, scoped, tag = 'scoped memory for tpu_custom_call.1']
    #allocation4 [shape = 's32[1]{0}', space=sflag, size = 0x4, scoped, tag = 'scoped memory for tpu_custom_call.1']
    #allocation5 [shape = 'u8[4096]{0}', space=vmem, size = 0x1000, scoped, tag = 'input window, operand 1, single buffered']
    #allocation6 [shape = 's32[1]{0}', space=sflag, size = 0x4, scoped, tag = 'scoped memory for tpu_custom_call.1']
    #allocation7 [shape = 'u8[131072]{0}', space=vmem, size = 0x20000, scoped, tag = 'input window, operand 2, single buffered']
    #allocation8 [shape = 'u8[131072]{0}', space=vmem, size = 0x20000, scoped, tag = 'input window, operand 4, single buffered']
    #allocation9 [shape = 's32[1]{0}', space=sflag, size = 0x4, scoped, tag = 'scoped memory for tpu_custom_call.1']
    #allocation10 [shape = 'u8[65536]{0}', space=vmem, size = 0x10000, scoped, tag = 'input window, operand 6, single buffered']
    #allocation11 [shape = 'u8[65536]{0}', space=vmem, size = 0x10000, scoped, tag = 'input window, operand 7, single buffered']
    #allocation12 [shape = 's32[1]{0}', space=sflag, size = 0x4, scoped, tag = 'scoped memory for tpu_custom_call.1']
    #allocation13 [shape = 'u8[65536]{0}', space=vmem, size = 0x10000, scoped, tag = 'input window, operand 8, single buffered']
    #allocation14 [shape = 'u8[65536]{0}', space=vmem, size = 0x10000, scoped, tag = 'input window, operand 9, single buffered']
    #allocation15 [shape = 's32[1]{0}', space=sflag, size = 0x4, scoped, tag = 'scoped memory for tpu_custom_call.1']
    #allocation16 [shape = 'u8[16384]{0}', space=vmem, size = 0x4000, scoped, tag = 'output window, operand 0, single buffered']
    %16 = vsyncpa [#allocation3], 0
    %17 = vsyncpa [#allocation6], 0
    %18 = vsyncpa [#allocation9], 0
    %19 = vsyncpa [#allocation12], 0
    %20 = vsyncpa [#allocation15], 0
    %21 = vsyncpa [#allocation4], 0
    // Predicated region
    $region2: #{tpu_custom_call.1} parent=1 // pred_check
      _
    $region3: #{tpu_custom_call.1} parent=1 // pred_check_branch
      %23 = sbr.rel (0) target = $region5
    $region4: #{tpu_custom_call.1} parent=1 // pred_region
      %s25 = ssub.s32 128, 128
      %26 = vsyncadd [#allocation3], %s25
      %s28 = sshll.u32 [#allocation2], 4
      %s29 = int_to_ptr.vmem [resolvable:$true] %s28
      %31 = dma.hbm_to_vmem [thread:$0]  %s0, 128, %s29, [#allocation3]
    $region5: #{tpu_custom_call.1} parent=1 // pred_fallthru
      _
    // Predicated region
    $region6: #{tpu_custom_call.1} parent=1 // pred_check
      _
    $region7: #{tpu_custom_call.1} parent=1 // pred_check_branch
      %33 = sbr.rel (0) target = $region9
    $region8: #{tpu_custom_call.1} parent=1 // pred_region
      %s35 = ssub.s32 128, 128
      %36 = vsyncadd [#allocation6], %s35
      %s38 = sshll.u32 [#allocation5], 4
      %s39 = int_to_ptr.vmem [resolvable:$true] %s38
      %41 = dma.hbm_to_vmem [thread:$0]  %s1, 128, %s39, [#allocation6]
    $region9: #{tpu_custom_call.1} parent=1 // pred_fallthru
      _
    // Predicated region
    $region10: #{tpu_custom_call.1} parent=1 // pred_check
      _
    $region11: #{tpu_custom_call.1} parent=1 // pred_check_branch
      %43 = sbr.rel (0) target = $region13
    $region12: #{tpu_custom_call.1} parent=1 // pred_region
      %s45 = ssub.s32 4096, 4096
      %46 = vsyncadd [#allocation6], %s45
      %s47 = sshll.u32 [#allocation7], 4
      %s48 = int_to_ptr.vmem [resolvable:$true] %s47
      %53 = dma.hbm_to_vmem [thread:$0]  %s2, 4096, %s48, [#allocation6], 256, 256, 16
    $region13: #{tpu_custom_call.1} parent=1 // pred_fallthru
      _
    // Predicated region
    $region14: #{tpu_custom_call.1} parent=1 // pred_check
      _
    $region15: #{tpu_custom_call.1} parent=1 // pred_check_branch
      %55 = sbr.rel (0) target = $region17
    $region16: #{tpu_custom_call.1} parent=1 // pred_region
      _
    $region17: #{tpu_custom_call.1} parent=1 // pred_fallthru
      _
    // Predicated region
    $region18: #{tpu_custom_call.1} parent=1 // pred_check
      _
    $region19: #{tpu_custom_call.1} parent=1 // pred_check_branch
      %57 = sbr.rel (0) target = $region21
    $region20: #{tpu_custom_call.1} parent=1 // pred_region
      %s59 = ssub.s32 4096, 4096
      %60 = vsyncadd [#allocation9], %s59
      %s61 = sshll.u32 [#allocation8], 4
      %s62 = int_to_ptr.vmem [resolvable:$true] %s61
      %67 = dma.hbm_to_vmem [thread:$0]  %s4, 4096, %s62, [#allocation9], 256, 256, 16
    $region21: #{tpu_custom_call.1} parent=1 // pred_fallthru
      _
    // Predicated region
    $region22: #{tpu_custom_call.1} parent=1 // pred_check
      _
    $region23: #{tpu_custom_call.1} parent=1 // pred_check_branch
      %69 = sbr.rel (0) target = $region25
    $region24: #{tpu_custom_call.1} parent=1 // pred_region
      _
    $region25: #{tpu_custom_call.1} parent=1 // pred_fallthru
      _
    // Predicated region
    $region26: #{tpu_custom_call.1} parent=1 // pred_check
      _
    $region27: #{tpu_custom_call.1} parent=1 // pred_check_branch
      %71 = sbr.rel (0) target = $region29
    $region28: #{tpu_custom_call.1} parent=1 // pred_region
      %s73 = ssub.s32 2048, 2048
      %74 = vsyncadd [#allocation9], %s73
      %s75 = sshll.u32 [#allocation10], 4
      %s76 = int_to_ptr.vmem [resolvable:$true] %s75
      %81 = dma.hbm_to_vmem [thread:$0]  %s6, 2048, %s76, [#allocation9], 128, 128, 8
    $region29: #{tpu_custom_call.1} parent=1 // pred_fallthru
      _
    // Predicated region
    $region30: #{tpu_custom_call.1} parent=1 // pred_check
      _
    $region31: #{tpu_custom_call.1} parent=1 // pred_check_branch
      %83 = sbr.rel (0) target = $region33
    $region32: #{tpu_custom_call.1} parent=1 // pred_region
      %s85 = ssub.s32 2048, 2048
      %86 = vsyncadd [#allocation12], %s85
      %s87 = sshll.u32 [#allocation11], 4
      %s88 = int_to_ptr.vmem [resolvable:$true] %s87
      %93 = dma.hbm_to_vmem [thread:$0]  %s7, 2048, %s88, [#allocation12], 128, 128, 8
    $region33: #{tpu_custom_call.1} parent=1 // pred_fallthru
      _
    // Predicated region
    $region34: #{tpu_custom_call.1} parent=1 // pred_check
      _
    $region35: #{tpu_custom_call.1} parent=1 // pred_check_branch
      %95 = sbr.rel (0) target = $region37
    $region36: #{tpu_custom_call.1} parent=1 // pred_region
      %s97 = ssub.s32 2048, 2048
      %98 = vsyncadd [#allocation12], %s97
      %s99 = sshll.u32 [#allocation13], 4
      %s100 = int_to_ptr.vmem [resolvable:$true] %s99
      %105 = dma.hbm_to_vmem [thread:$0]  %s8, 2048, %s100, [#allocation12], 128, 128, 8
    $region37: #{tpu_custom_call.1} parent=1 // pred_fallthru
      _
    // Predicated region
    $region38: #{tpu_custom_call.1} parent=1 // pred_check
      _
    $region39: #{tpu_custom_call.1} parent=1 // pred_check_branch
      %107 = sbr.rel (0) target = $region41
    $region40: #{tpu_custom_call.1} parent=1 // pred_region
      %s109 = ssub.s32 2048, 2048
      %110 = vsyncadd [#allocation15], %s109
      %s111 = sshll.u32 [#allocation14], 4
      %s112 = int_to_ptr.vmem [resolvable:$true] %s111
      %117 = dma.hbm_to_vmem [thread:$0]  %s9, 2048, %s112, [#allocation15], 128, 128, 8
    $region41: #{tpu_custom_call.1} parent=1 // pred_fallthru
      _
    // Predicated region
    $region42: #{tpu_custom_call.1} parent=1 // pred_check
      _
    $region43: #{tpu_custom_call.1} parent=1 // pred_check_branch
      %119 = sbr.rel (0) target = $region45
    $region44: #{tpu_custom_call.1} parent=1 // pred_region
      _
    $region45: #{tpu_custom_call.1} parent=1 // pred_fallthru
      _
    // Predicated region
    $region46: #{tpu_custom_call.1} parent=1 // pred_check
      _
    $region47: #{tpu_custom_call.1} parent=1 // pred_check_branch
      %121 = sbr.rel (0) target = $region49
    $region48: #{tpu_custom_call.1} parent=1 // pred_region
      %122 = dma.done [#allocation3], 128
    $region49: #{tpu_custom_call.1} parent=1 // pred_fallthru
      _
    // Predicated region
    $region50: #{tpu_custom_call.1} parent=1 // pred_check
      _
    $region51: #{tpu_custom_call.1} parent=1 // pred_check_branch
      %124 = sbr.rel (0) target = $region53
    $region52: #{tpu_custom_call.1} parent=1 // pred_region
      %125 = dma.done [#allocation6], 128
    $region53: #{tpu_custom_call.1} parent=1 // pred_fallthru
      _
    // Predicated region
    $region54: #{tpu_custom_call.1} parent=1 // pred_check
      _
    $region55: #{tpu_custom_call.1} parent=1 // pred_check_branch
      %127 = sbr.rel (0) target = $region57
    $region56: #{tpu_custom_call.1} parent=1 // pred_region
      %128 = dma.done [#allocation6], 4096
    $region57: #{tpu_custom_call.1} parent=1 // pred_fallthru
      _
    // Predicated region
    $region58: #{tpu_custom_call.1} parent=1 // pred_check
      _
    $region59: #{tpu_custom_call.1} parent=1 // pred_check_branch
      %130 = sbr.rel (0) target = $region61
    $region60: #{tpu_custom_call.1} parent=1 // pred_region
      %131 = dma.done [#allocation9], 4096
    $region61: #{tpu_custom_call.1} parent=1 // pred_fallthru
      _
    // Predicated region
    $region62: #{tpu_custom_call.1} parent=1 // pred_check
      _
    $region63: #{tpu_custom_call.1} parent=1 // pred_check_branch
      %133 = sbr.rel (0) target = $region65
    $region64: #{tpu_custom_call.1} parent=1 // pred_region
      %134 = dma.done [#allocation9], 2048
    $region65: #{tpu_custom_call.1} parent=1 // pred_fallthru
      _
    // Predicated region
    $region66: #{tpu_custom_call.1} parent=1 // pred_check
      _
    $region67: #{tpu_custom_call.1} parent=1 // pred_check_branch
      %136 = sbr.rel (0) target = $region69
    $region68: #{tpu_custom_call.1} parent=1 // pred_region
      %137 = dma.done [#allocation12], 2048
    $region69: #{tpu_custom_call.1} parent=1 // pred_fallthru
      _
    // Predicated region
    $region70: #{tpu_custom_call.1} parent=1 // pred_check
      _
    $region71: #{tpu_custom_call.1} parent=1 // pred_check_branch
      %139 = sbr.rel (0) target = $region73
    $region72: #{tpu_custom_call.1} parent=1 // pred_region
      %140 = dma.done [#allocation12], 2048
    $region73: #{tpu_custom_call.1} parent=1 // pred_fallthru
      _
    // Predicated region
    $region74: #{tpu_custom_call.1} parent=1 // pred_check
      _
    $region75: #{tpu_custom_call.1} parent=1 // pred_check_branch
      %142 = sbr.rel (0) target = $region77
    $region76: #{tpu_custom_call.1} parent=1 // pred_region
      %143 = dma.done [#allocation15], 2048
    $region77: #{tpu_custom_call.1} parent=1 // pred_fallthru
      _
    %v144 = vld [vmem:[#allocation2] sm:$0xff]
    %v145 = vld [vmem:[#allocation7] sm:$0xff]
    %v146 = vld [vmem:[#allocation7 + $0x8] sm:$0xff]
    %v147 = vld [vmem:[#allocation7 + $0x10] sm:$0xff]
    %v148 = vld [vmem:[#allocation7 + $0x18] sm:$0xff]
    %v149 = vld [vmem:[#allocation7 + $0x20] sm:$0xff]
    %v150 = vld [vmem:[#allocation7 + $0x28] sm:$0xff]
    %v151 = vld [vmem:[#allocation7 + $0x30] sm:$0xff]
    %v152 = vld [vmem:[#allocation7 + $0x38] sm:$0xff]
    %v153 = vld [vmem:[#allocation7 + $0x40] sm:$0xff]
    %v154 = vld [vmem:[#allocation7 + $0x48] sm:$0xff]
    %v155 = vld [vmem:[#allocation7 + $0x50] sm:$0xff]
    %v156 = vld [vmem:[#allocation7 + $0x58] sm:$0xff]
    %v157 = vld [vmem:[#allocation7 + $0x60] sm:$0xff]
    %v158 = vld [vmem:[#allocation7 + $0x68] sm:$0xff]
    %v159 = vld [vmem:[#allocation7 + $0x70] sm:$0xff]
    %v160 = vld [vmem:[#allocation7 + $0x78] sm:$0xff]
    %v161 = vld [vmem:[#allocation7 + $0x80] sm:$0xff]
    %v162 = vld [vmem:[#allocation7 + $0x88] sm:$0xff]
    %v163 = vld [vmem:[#allocation7 + $0x90] sm:$0xff]
    %v164 = vld [vmem:[#allocation7 + $0x98] sm:$0xff]
    %v165 = vld [vmem:[#allocation7 + $0xa0] sm:$0xff]
    %v166 = vld [vmem:[#allocation7 + $0xa8] sm:$0xff]
    %v167 = vld [vmem:[#allocation7 + $0xb0] sm:$0xff]
    %v168 = vld [vmem:[#allocation7 + $0xb8] sm:$0xff]
    %v169 = vld [vmem:[#allocation7 + $0xc0] sm:$0xff]
    %v170 = vld [vmem:[#allocation7 + $0xc8] sm:$0xff]
    %v171 = vld [vmem:[#allocation7 + $0xd0] sm:$0xff]
    %v172 = vld [vmem:[#allocation7 + $0xd8] sm:$0xff]
    %v173 = vld [vmem:[#allocation7 + $0xe0] sm:$0xff]
    %v174 = vld [vmem:[#allocation7 + $0xe8] sm:$0xff]
    %v175 = vld [vmem:[#allocation7 + $0xf0] sm:$0xff]
    %v176 = vld [vmem:[#allocation7 + $0xf8] sm:$0xff]
    %v177 = vld [vmem:[%s3] sm:$0x3]
    %v179 = vlaneseq
    %v180 = vshrl.u32 %v179, 7
    %v181 = vsub.s32 0, %v180
    %v182 = vrot.slane %v177, %v181
    %v183 = vlaneseq
    %v184 = vshrl.u32 %v183, 7
    %v185 = vsub.s32 1, %v184
    %v186 = vrot.slane %v177, %v185
    %189 = vmatprep.subr.mxu0 %v146
    %190 = vmatpush1.msra.mxu0 %v145
    %191 = vmatprep.subr.mxu0 %v148
    %192 = vmatpush1.msra.mxu0 %v147
    %193 = vmatprep.subr.mxu0 %v150
    %194 = vmatpush1.msra.mxu0 %v149
    %195 = vmatprep.subr.mxu0 %v152
    %196 = vmatpush1.msra.mxu0 %v151
    %197 = vmatprep.subr.mxu0 %v154
    %198 = vmatpush1.msra.mxu0 %v153
    %199 = vmatprep.subr.mxu0 %v156
    %200 = vmatpush1.msra.mxu0 %v155
    %201 = vmatprep.subr.mxu0 %v158
    %202 = vmatpush1.msra.mxu0 %v157
    %203 = vmatprep.subr.mxu0 %v160
    %204 = vmatpush1.msra.mxu0 %v159
    %205 = vmatprep.subr.mxu0 %v162
    %206 = vmatpush1.msra.mxu0 %v161
    %207 = vmatprep.subr.mxu0 %v164
    %208 = vmatpush1.msra.mxu0 %v163
    %209 = vmatprep.subr.mxu0 %v166
    %210 = vmatpush1.msra.mxu0 %v165
    %211 = vmatprep.subr.mxu0 %v168
    %212 = vmatpush1.msra.mxu0 %v167
    %213 = vmatprep.subr.mxu0 %v170
    %214 = vmatpush1.msra.mxu0 %v169
    %215 = vmatprep.subr.mxu0 %v172
    %216 = vmatpush1.msra.mxu0 %v171
    %217 = vmatprep.subr.mxu0 %v174
    %218 = vmatpush1.msra.mxu0 %v173
    %219 = vmatprep.subr.mxu0 %v176
    %220 = vmatpush1.msra.mxu0 %v175
    %221 = vmatprep.subr.mxu0 0.0
    %222 = vmatpush1.msra.mxu0 0.0
    %223 = vmatprep.subr.mxu0 0.0
    %224 = vmatpush1.msra.mxu0 0.0
    %225 = vmatprep.subr.mxu0 0.0
    %226 = vmatpush1.msra.mxu0 0.0
    %227 = vmatprep.subr.mxu0 0.0
    %228 = vmatpush1.msra.mxu0 0.0
    %229 = vmatprep.subr.mxu0 0.0
    %230 = vmatpush1.msra.mxu0 0.0
    %231 = vmatprep.subr.mxu0 0.0
    %232 = vmatpush1.msra.mxu0 0.0
    %233 = vmatprep.subr.mxu0 0.0
    %234 = vmatpush1.msra.mxu0 0.0
    %235 = vmatprep.subr.mxu0 0.0
    %236 = vmatpush1.msra.mxu0 0.0
    %237 = vmatprep.subr.mxu0 0.0
    %238 = vmatpush1.msra.mxu0 0.0
    %239 = vmatprep.subr.mxu0 0.0
    %240 = vmatpush1.msra.mxu0 0.0
    %241 = vmatprep.subr.mxu0 0.0
    %242 = vmatpush1.msra.mxu0 0.0
    %243 = vmatprep.subr.mxu0 0.0
    %244 = vmatpush1.msra.mxu0 0.0
    %245 = vmatprep.subr.mxu0 0.0
    %246 = vmatpush1.msra.mxu0 0.0
    %247 = vmatprep.subr.mxu0 0.0
    %248 = vmatpush1.msra.mxu0 0.0
    %249 = vmatprep.subr.mxu0 0.0
    %250 = vmatpush1.msra.mxu0 0.0
    %251 = vmatprep.subr.mxu0 0.0
    %252 = vmatpush1.msra.mxu0 0.0
    %253 = vmatprep.mubr.f32.mxu0 0.0
    %254 = vmatmul.mubr.f32.gmra.mrb[0].mxu0 %v144
    %v255 = vpop.f32.mrb[0].mxu0
    %v256 = vadd.f32 %v182, %v255
    %v257 = vpop.f32.mrb[0].mxu0
    %v258 = vadd.f32 %v186, %v257
    %259 = vdwg.mxu0
    %v260 = vld [vmem:[#allocation5] sm:$0xff]
    %v261 = vld [vmem:[#allocation8] sm:$0xff]
    %v262 = vld [vmem:[#allocation8 + $0x8] sm:$0xff]
    %v263 = vld [vmem:[#allocation8 + $0x10] sm:$0xff]
    %v264 = vld [vmem:[#allocation8 + $0x18] sm:$0xff]
    %v265 = vld [vmem:[#allocation8 + $0x20] sm:$0xff]
    %v266 = vld [vmem:[#allocation8 + $0x28] sm:$0xff]
    %v267 = vld [vmem:[#allocation8 + $0x30] sm:$0xff]
    %v268 = vld [vmem:[#allocation8 + $0x38] sm:$0xff]
    %v269 = vld [vmem:[#allocation8 + $0x40] sm:$0xff]
    %v270 = vld [vmem:[#allocation8 + $0x48] sm:$0xff]
    %v271 = vld [vmem:[#allocation8 + $0x50] sm:$0xff]
    %v272 = vld [vmem:[#allocation8 + $0x58] sm:$0xff]
    %v273 = vld [vmem:[#allocation8 + $0x60] sm:$0xff]
    %v274 = vld [vmem:[#allocation8 + $0x68] sm:$0xff]
    %v275 = vld [vmem:[#allocation8 + $0x70] sm:$0xff]
    %v276 = vld [vmem:[#allocation8 + $0x78] sm:$0xff]
    %v277 = vld [vmem:[#allocation8 + $0x80] sm:$0xff]
    %v278 = vld [vmem:[#allocation8 + $0x88] sm:$0xff]
    %v279 = vld [vmem:[#allocation8 + $0x90] sm:$0xff]
    %v280 = vld [vmem:[#allocation8 + $0x98] sm:$0xff]
    %v281 = vld [vmem:[#allocation8 + $0xa0] sm:$0xff]
    %v282 = vld [vmem:[#allocation8 + $0xa8] sm:$0xff]
    %v283 = vld [vmem:[#allocation8 + $0xb0] sm:$0xff]
    %v284 = vld [vmem:[#allocation8 + $0xb8] sm:$0xff]
    %v285 = vld [vmem:[#allocation8 + $0xc0] sm:$0xff]
    %v286 = vld [vmem:[#allocation8 + $0xc8] sm:$0xff]
    %v287 = vld [vmem:[#allocation8 + $0xd0] sm:$0xff]
    %v288 = vld [vmem:[#allocation8 + $0xd8] sm:$0xff]
    %v289 = vld [vmem:[#allocation8 + $0xe0] sm:$0xff]
    %v290 = vld [vmem:[#allocation8 + $0xe8] sm:$0xff]
    %v291 = vld [vmem:[#allocation8 + $0xf0] sm:$0xff]
    %v292 = vld [vmem:[#allocation8 + $0xf8] sm:$0xff]
    %v293 = vld [vmem:[%s5] sm:$0x3]
    %v295 = vlaneseq
    %v296 = vshrl.u32 %v295, 7
    %v297 = vsub.s32 0, %v296
    %v298 = vrot.slane %v293, %v297
    %v299 = vlaneseq
    %v300 = vshrl.u32 %v299, 7
    %v301 = vsub.s32 1, %v300
    %v302 = vrot.slane %v293, %v301
    %305 = vmatprep.subr.mxu0 %v262
    %306 = vmatpush1.msra.mxu0 %v261
    %307 = vmatprep.subr.mxu0 %v264
    %308 = vmatpush1.msra.mxu0 %v263
    %309 = vmatprep.subr.mxu0 %v266
    %310 = vmatpush1.msra.mxu0 %v265
    %311 = vmatprep.subr.mxu0 %v268
    %312 = vmatpush1.msra.mxu0 %v267
    %313 = vmatprep.subr.mxu0 %v270
    %314 = vmatpush1.msra.mxu0 %v269
    %315 = vmatprep.subr.mxu0 %v272
    %316 = vmatpush1.msra.mxu0 %v271
    %317 = vmatprep.subr.mxu0 %v274
    %318 = vmatpush1.msra.mxu0 %v273
    %319 = vmatprep.subr.mxu0 %v276
    %320 = vmatpush1.msra.mxu0 %v275
    %321 = vmatprep.subr.mxu0 %v278
    %322 = vmatpush1.msra.mxu0 %v277
    %323 = vmatprep.subr.mxu0 %v280
    %324 = vmatpush1.msra.mxu0 %v279
    %325 = vmatprep.subr.mxu0 %v282
    %326 = vmatpush1.msra.mxu0 %v281
    %327 = vmatprep.subr.mxu0 %v284
    %328 = vmatpush1.msra.mxu0 %v283
    %329 = vmatprep.subr.mxu0 %v286
    %330 = vmatpush1.msra.mxu0 %v285
    %331 = vmatprep.subr.mxu0 %v288
    %332 = vmatpush1.msra.mxu0 %v287
    %333 = vmatprep.subr.mxu0 %v290
    %334 = vmatpush1.msra.mxu0 %v289
    %335 = vmatprep.subr.mxu0 %v292
    %336 = vmatpush1.msra.mxu0 %v291
    %337 = vmatprep.subr.mxu0 0.0
    %338 = vmatpush1.msra.mxu0 0.0
    %339 = vmatprep.subr.mxu0 0.0
    %340 = vmatpush1.msra.mxu0 0.0
    %341 = vmatprep.subr.mxu0 0.0
    %342 = vmatpush1.msra.mxu0 0.0
    %343 = vmatprep.subr.mxu0 0.0
    %344 = vmatpush1.msra.mxu0 0.0
    %345 = vmatprep.subr.mxu0 0.0
    %346 = vmatpush1.msra.mxu0 0.0
    %347 = vmatprep.subr.mxu0 0.0
    %348 = vmatpush1.msra.mxu0 0.0
    %349 = vmatprep.subr.mxu0 0.0
    %350 = vmatpush1.msra.mxu0 0.0
    %351 = vmatprep.subr.mxu0 0.0
    %352 = vmatpush1.msra.mxu0 0.0
    %353 = vmatprep.subr.mxu0 0.0
    %354 = vmatpush1.msra.mxu0 0.0
    %355 = vmatprep.subr.mxu0 0.0
    %356 = vmatpush1.msra.mxu0 0.0
    %357 = vmatprep.subr.mxu0 0.0
    %358 = vmatpush1.msra.mxu0 0.0
    %359 = vmatprep.subr.mxu0 0.0
    %360 = vmatpush1.msra.mxu0 0.0
    %361 = vmatprep.subr.mxu0 0.0
    %362 = vmatpush1.msra.mxu0 0.0
    %363 = vmatprep.subr.mxu0 0.0
    %364 = vmatpush1.msra.mxu0 0.0
    %365 = vmatprep.subr.mxu0 0.0
    %366 = vmatpush1.msra.mxu0 0.0
    %367 = vmatprep.subr.mxu0 0.0
    %368 = vmatpush1.msra.mxu0 0.0
    %369 = vmatprep.mubr.f32.mxu0 0.0
    %370 = vmatmul.mubr.f32.gmra.mrb[0].mxu0 %v260
    %v371 = vpop.f32.mrb[0].mxu0
    %v372 = vadd.f32 %v298, %v371
    %v373 = vpop.f32.mrb[0].mxu0
    %v374 = vadd.f32 %v302, %v373
    %375 = vdwg.mxu0
    %v376 = vmax.f32 %v256, 0.0
    %v377 = vmax.f32 %v258, 0.0
    %v378 = vmax.f32 %v372, 0.0
    %v379 = vmax.f32 %v374, 0.0
    %v380 = vld [vmem:[#allocation10] sm:$0xff]
    %v381 = vld [vmem:[#allocation10 + $0x8] sm:$0xff]
    %v382 = vld [vmem:[#allocation10 + $0x10] sm:$0xff]
    %v383 = vld [vmem:[#allocation10 + $0x18] sm:$0xff]
    %v384 = vld [vmem:[#allocation10 + $0x20] sm:$0xff]
    %v385 = vld [vmem:[#allocation10 + $0x28] sm:$0xff]
    %v386 = vld [vmem:[#allocation10 + $0x30] sm:$0xff]
    %v387 = vld [vmem:[#allocation10 + $0x38] sm:$0xff]
    %v388 = vld [vmem:[#allocation10 + $0x40] sm:$0xff]
    %v389 = vld [vmem:[#allocation10 + $0x48] sm:$0xff]
    %v390 = vld [vmem:[#allocation10 + $0x50] sm:$0xff]
    %v391 = vld [vmem:[#allocation10 + $0x58] sm:$0xff]
    %v392 = vld [vmem:[#allocation10 + $0x60] sm:$0xff]
    %v393 = vld [vmem:[#allocation10 + $0x68] sm:$0xff]
    %v394 = vld [vmem:[#allocation10 + $0x70] sm:$0xff]
    %v395 = vld [vmem:[#allocation10 + $0x78] sm:$0xff]
    %396 = vmatprep.subr.mxu0 0.0
    %397 = vmatpush1.msra.mxu0 %v380
    %398 = vmatprep.subr.mxu0 0.0
    %399 = vmatpush1.msra.mxu0 %v381
    %400 = vmatprep.subr.mxu0 0.0
    %401 = vmatpush1.msra.mxu0 %v382
    %402 = vmatprep.subr.mxu0 0.0
    %403 = vmatpush1.msra.mxu0 %v383
    %404 = vmatprep.subr.mxu0 0.0
    %405 = vmatpush1.msra.mxu0 %v384
    %406 = vmatprep.subr.mxu0 0.0
    %407 = vmatpush1.msra.mxu0 %v385
    %408 = vmatprep.subr.mxu0 0.0
    %409 = vmatpush1.msra.mxu0 %v386
    %410 = vmatprep.subr.mxu0 0.0
    %411 = vmatpush1.msra.mxu0 %v387
    %412 = vmatprep.subr.mxu0 0.0
    %413 = vmatpush1.msra.mxu0 %v388
    %414 = vmatprep.subr.mxu0 0.0
    %415 = vmatpush1.msra.mxu0 %v389
    %416 = vmatprep.subr.mxu0 0.0
    %417 = vmatpush1.msra.mxu0 %v390
    %418 = vmatprep.subr.mxu0 0.0
    %419 = vmatpush1.msra.mxu0 %v391
    %420 = vmatprep.subr.mxu0 0.0
    %421 = vmatpush1.msra.mxu0 %v392
    %422 = vmatprep.subr.mxu0 0.0
    %423 = vmatpush1.msra.mxu0 %v393
    %424 = vmatprep.subr.mxu0 0.0
    %425 = vmatpush1.msra.mxu0 %v394
    %426 = vmatprep.subr.mxu0 0.0
    %427 = vmatpush1.msra.mxu0 %v395
    %428 = vmatprep.subr.mxu0 0.0
    %429 = vmatpush1.msra.mxu0 0.0
    %430 = vmatprep.subr.mxu0 0.0
    %431 = vmatpush1.msra.mxu0 0.0
    %432 = vmatprep.subr.mxu0 0.0
    %433 = vmatpush1.msra.mxu0 0.0
    %434 = vmatprep.subr.mxu0 0.0
    %435 = vmatpush1.msra.mxu0 0.0
    %436 = vmatprep.subr.mxu0 0.0
    %437 = vmatpush1.msra.mxu0 0.0
    %438 = vmatprep.subr.mxu0 0.0
    %439 = vmatpush1.msra.mxu0 0.0
    %440 = vmatprep.subr.mxu0 0.0
    %441 = vmatpush1.msra.mxu0 0.0
    %442 = vmatprep.subr.mxu0 0.0
    %443 = vmatpush1.msra.mxu0 0.0
    %444 = vmatprep.subr.mxu0 0.0
    %445 = vmatpush1.msra.mxu0 0.0
    %446 = vmatprep.subr.mxu0 0.0
    %447 = vmatpush1.msra.mxu0 0.0
    %448 = vmatprep.subr.mxu0 0.0
    %449 = vmatpush1.msra.mxu0 0.0
    %450 = vmatprep.subr.mxu0 0.0
    %451 = vmatpush1.msra.mxu0 0.0
    %452 = vmatprep.subr.mxu0 0.0
    %453 = vmatpush1.msra.mxu0 0.0
    %454 = vmatprep.subr.mxu0 0.0
    %455 = vmatpush1.msra.mxu0 0.0
    %456 = vmatprep.subr.mxu0 0.0
    %457 = vmatpush1.msra.mxu0 0.0
    %458 = vmatprep.subr.mxu0 0.0
    %459 = vmatpush1.msra.mxu0 0.0
    %460 = vmatprep.mubr.f32.mxu0 0.0
    %461 = vmatmul.mubr.f32.gmra.mrb[0].mxu0 %v376
    %v462 = vpop.f32.mrb[0].mxu0
    %v463 = vadd.f32 0.0, %v462
    %v464 = vpop.f32.mrb[0].mxu0
    %465 = vdwg.mxu0
    %v466 = vld [vmem:[#allocation11] sm:$0xff]
    %v467 = vld [vmem:[#allocation11 + $0x8] sm:$0xff]
    %v468 = vld [vmem:[#allocation11 + $0x10] sm:$0xff]
    %v469 = vld [vmem:[#allocation11 + $0x18] sm:$0xff]
    %v470 = vld [vmem:[#allocation11 + $0x20] sm:$0xff]
    %v471 = vld [vmem:[#allocation11 + $0x28] sm:$0xff]
    %v472 = vld [vmem:[#allocation11 + $0x30] sm:$0xff]
    %v473 = vld [vmem:[#allocation11 + $0x38] sm:$0xff]
    %v474 = vld [vmem:[#allocation11 + $0x40] sm:$0xff]
    %v475 = vld [vmem:[#allocation11 + $0x48] sm:$0xff]
    %v476 = vld [vmem:[#allocation11 + $0x50] sm:$0xff]
    %v477 = vld [vmem:[#allocation11 + $0x58] sm:$0xff]
    %v478 = vld [vmem:[#allocation11 + $0x60] sm:$0xff]
    %v479 = vld [vmem:[#allocation11 + $0x68] sm:$0xff]
    %v480 = vld [vmem:[#allocation11 + $0x70] sm:$0xff]
    %v481 = vld [vmem:[#allocation11 + $0x78] sm:$0xff]
    %482 = vmatprep.subr.mxu0 0.0
    %483 = vmatpush1.msra.mxu0 %v466
    %484 = vmatprep.subr.mxu0 0.0
    %485 = vmatpush1.msra.mxu0 %v467
    %486 = vmatprep.subr.mxu0 0.0
    %487 = vmatpush1.msra.mxu0 %v468
    %488 = vmatprep.subr.mxu0 0.0
    %489 = vmatpush1.msra.mxu0 %v469
    %490 = vmatprep.subr.mxu0 0.0
    %491 = vmatpush1.msra.mxu0 %v470
    %492 = vmatprep.subr.mxu0 0.0
    %493 = vmatpush1.msra.mxu0 %v471
    %494 = vmatprep.subr.mxu0 0.0
    %495 = vmatpush1.msra.mxu0 %v472
    %496 = vmatprep.subr.mxu0 0.0
    %497 = vmatpush1.msra.mxu0 %v473
    %498 = vmatprep.subr.mxu0 0.0
    %499 = vmatpush1.msra.mxu0 %v474
    %500 = vmatprep.subr.mxu0 0.0
    %501 = vmatpush1.msra.mxu0 %v475
    %502 = vmatprep.subr.mxu0 0.0
    %503 = vmatpush1.msra.mxu0 %v476
    %504 = vmatprep.subr.mxu0 0.0
    %505 = vmatpush1.msra.mxu0 %v477
    %506 = vmatprep.subr.mxu0 0.0
    %507 = vmatpush1.msra.mxu0 %v478
    %508 = vmatprep.subr.mxu0 0.0
    %509 = vmatpush1.msra.mxu0 %v479
    %510 = vmatprep.subr.mxu0 0.0
    %511 = vmatpush1.msra.mxu0 %v480
    %512 = vmatprep.subr.mxu0 0.0
    %513 = vmatpush1.msra.mxu0 %v481
    %514 = vmatprep.subr.mxu0 0.0
    %515 = vmatpush1.msra.mxu0 0.0
    %516 = vmatprep.subr.mxu0 0.0
    %517 = vmatpush1.msra.mxu0 0.0
    %518 = vmatprep.subr.mxu0 0.0
    %519 = vmatpush1.msra.mxu0 0.0
    %520 = vmatprep.subr.mxu0 0.0
    %521 = vmatpush1.msra.mxu0 0.0
    %522 = vmatprep.subr.mxu0 0.0
    %523 = vmatpush1.msra.mxu0 0.0
    %524 = vmatprep.subr.mxu0 0.0
    %525 = vmatpush1.msra.mxu0 0.0
    %526 = vmatprep.subr.mxu0 0.0
    %527 = vmatpush1.msra.mxu0 0.0
    %528 = vmatprep.subr.mxu0 0.0
    %529 = vmatpush1.msra.mxu0 0.0
    %530 = vmatprep.subr.mxu0 0.0
    %531 = vmatpush1.msra.mxu0 0.0
    %532 = vmatprep.subr.mxu0 0.0
    %533 = vmatpush1.msra.mxu0 0.0
    %534 = vmatprep.subr.mxu0 0.0
    %535 = vmatpush1.msra.mxu0 0.0
    %536 = vmatprep.subr.mxu0 0.0
    %537 = vmatpush1.msra.mxu0 0.0
    %538 = vmatprep.subr.mxu0 0.0
    %539 = vmatpush1.msra.mxu0 0.0
    %540 = vmatprep.subr.mxu0 0.0
    %541 = vmatpush1.msra.mxu0 0.0
    %542 = vmatprep.subr.mxu0 0.0
    %543 = vmatpush1.msra.mxu0 0.0
    %544 = vmatprep.subr.mxu0 0.0
    %545 = vmatpush1.msra.mxu0 0.0
    %546 = vmatprep.mubr.f32.mxu0 0.0
    %547 = vmatmul.mubr.f32.gmra.mrb[0].mxu0 %v378
    %v548 = vpop.f32.mrb[0].mxu0
    %v549 = vadd.f32 0.0, %v548
    %v550 = vpop.f32.mrb[0].mxu0
    %551 = vdwg.mxu0
    %v552 = vld [vmem:[#allocation13] sm:$0xff]
    %v553 = vld [vmem:[#allocation13 + $0x8] sm:$0xff]
    %v554 = vld [vmem:[#allocation13 + $0x10] sm:$0xff]
    %v555 = vld [vmem:[#allocation13 + $0x18] sm:$0xff]
    %v556 = vld [vmem:[#allocation13 + $0x20] sm:$0xff]
    %v557 = vld [vmem:[#allocation13 + $0x28] sm:$0xff]
    %v558 = vld [vmem:[#allocation13 + $0x30] sm:$0xff]
    %v559 = vld [vmem:[#allocation13 + $0x38] sm:$0xff]
    %v560 = vld [vmem:[#allocation13 + $0x40] sm:$0xff]
    %v561 = vld [vmem:[#allocation13 + $0x48] sm:$0xff]
    %v562 = vld [vmem:[#allocation13 + $0x50] sm:$0xff]
    %v563 = vld [vmem:[#allocation13 + $0x58] sm:$0xff]
    %v564 = vld [vmem:[#allocation13 + $0x60] sm:$0xff]
    %v565 = vld [vmem:[#allocation13 + $0x68] sm:$0xff]
    %v566 = vld [vmem:[#allocation13 + $0x70] sm:$0xff]
    %v567 = vld [vmem:[#allocation13 + $0x78] sm:$0xff]
    %568 = vmatprep.subr.mxu0 0.0
    %569 = vmatpush1.msra.mxu0 %v552
    %570 = vmatprep.subr.mxu0 0.0
    %571 = vmatpush1.msra.mxu0 %v553
    %572 = vmatprep.subr.mxu0 0.0
    %573 = vmatpush1.msra.mxu0 %v554
    %574 = vmatprep.subr.mxu0 0.0
    %575 = vmatpush1.msra.mxu0 %v555
    %576 = vmatprep.subr.mxu0 0.0
    %577 = vmatpush1.msra.mxu0 %v556
    %578 = vmatprep.subr.mxu0 0.0
    %579 = vmatpush1.msra.mxu0 %v557
    %580 = vmatprep.subr.mxu0 0.0
    %581 = vmatpush1.msra.mxu0 %v558
    %582 = vmatprep.subr.mxu0 0.0
    %583 = vmatpush1.msra.mxu0 %v559
    %584 = vmatprep.subr.mxu0 0.0
    %585 = vmatpush1.msra.mxu0 %v560
    %586 = vmatprep.subr.mxu0 0.0
    %587 = vmatpush1.msra.mxu0 %v561
    %588 = vmatprep.subr.mxu0 0.0
    %589 = vmatpush1.msra.mxu0 %v562
    %590 = vmatprep.subr.mxu0 0.0
    %591 = vmatpush1.msra.mxu0 %v563
    %592 = vmatprep.subr.mxu0 0.0
    %593 = vmatpush1.msra.mxu0 %v564
    %594 = vmatprep.subr.mxu0 0.0
    %595 = vmatpush1.msra.mxu0 %v565
    %596 = vmatprep.subr.mxu0 0.0
    %597 = vmatpush1.msra.mxu0 %v566
    %598 = vmatprep.subr.mxu0 0.0
    %599 = vmatpush1.msra.mxu0 %v567
    %600 = vmatprep.subr.mxu0 0.0
    %601 = vmatpush1.msra.mxu0 0.0
    %602 = vmatprep.subr.mxu0 0.0
    %603 = vmatpush1.msra.mxu0 0.0
    %604 = vmatprep.subr.mxu0 0.0
    %605 = vmatpush1.msra.mxu0 0.0
    %606 = vmatprep.subr.mxu0 0.0
    %607 = vmatpush1.msra.mxu0 0.0
    %608 = vmatprep.subr.mxu0 0.0
    %609 = vmatpush1.msra.mxu0 0.0
    %610 = vmatprep.subr.mxu0 0.0
    %611 = vmatpush1.msra.mxu0 0.0
    %612 = vmatprep.subr.mxu0 0.0
    %613 = vmatpush1.msra.mxu0 0.0
    %614 = vmatprep.subr.mxu0 0.0
    %615 = vmatpush1.msra.mxu0 0.0
    %616 = vmatprep.subr.mxu0 0.0
    %617 = vmatpush1.msra.mxu0 0.0
    %618 = vmatprep.subr.mxu0 0.0
    %619 = vmatpush1.msra.mxu0 0.0
    %620 = vmatprep.subr.mxu0 0.0
    %621 = vmatpush1.msra.mxu0 0.0
    %622 = vmatprep.subr.mxu0 0.0
    %623 = vmatpush1.msra.mxu0 0.0
    %624 = vmatprep.subr.mxu0 0.0
    %625 = vmatpush1.msra.mxu0 0.0
    %626 = vmatprep.subr.mxu0 0.0
    %627 = vmatpush1.msra.mxu0 0.0
    %628 = vmatprep.subr.mxu0 0.0
    %629 = vmatpush1.msra.mxu0 0.0
    %630 = vmatprep.subr.mxu0 0.0
    %631 = vmatpush1.msra.mxu0 0.0
    %632 = vmatprep.mubr.f32.mxu0 0.0
    %633 = vmatmul.mubr.f32.gmra.mrb[0].mxu0 %v377
    %v634 = vpop.f32.mrb[0].mxu0
    %v635 = vadd.f32 0.0, %v634
    %v636 = vpop.f32.mrb[0].mxu0
    %637 = vdwg.mxu0
    %v638 = vld [vmem:[#allocation14] sm:$0xff]
    %v639 = vld [vmem:[#allocation14 + $0x8] sm:$0xff]
    %v640 = vld [vmem:[#allocation14 + $0x10] sm:$0xff]
    %v641 = vld [vmem:[#allocation14 + $0x18] sm:$0xff]
    %v642 = vld [vmem:[#allocation14 + $0x20] sm:$0xff]
    %v643 = vld [vmem:[#allocation14 + $0x28] sm:$0xff]
    %v644 = vld [vmem:[#allocation14 + $0x30] sm:$0xff]
    %v645 = vld [vmem:[#allocation14 + $0x38] sm:$0xff]
    %v646 = vld [vmem:[#allocation14 + $0x40] sm:$0xff]
    %v647 = vld [vmem:[#allocation14 + $0x48] sm:$0xff]
    %v648 = vld [vmem:[#allocation14 + $0x50] sm:$0xff]
    %v649 = vld [vmem:[#allocation14 + $0x58] sm:$0xff]
    %v650 = vld [vmem:[#allocation14 + $0x60] sm:$0xff]
    %v651 = vld [vmem:[#allocation14 + $0x68] sm:$0xff]
    %v652 = vld [vmem:[#allocation14 + $0x70] sm:$0xff]
    %v653 = vld [vmem:[#allocation14 + $0x78] sm:$0xff]
    %654 = vmatprep.subr.mxu0 0.0
    %655 = vmatpush1.msra.mxu0 %v638
    %656 = vmatprep.subr.mxu0 0.0
    %657 = vmatpush1.msra.mxu0 %v639
    %658 = vmatprep.subr.mxu0 0.0
    %659 = vmatpush1.msra.mxu0 %v640
    %660 = vmatprep.subr.mxu0 0.0
    %661 = vmatpush1.msra.mxu0 %v641
    %662 = vmatprep.subr.mxu0 0.0
    %663 = vmatpush1.msra.mxu0 %v642
    %664 = vmatprep.subr.mxu0 0.0
    %665 = vmatpush1.msra.mxu0 %v643
    %666 = vmatprep.subr.mxu0 0.0
    %667 = vmatpush1.msra.mxu0 %v644
    %668 = vmatprep.subr.mxu0 0.0
    %669 = vmatpush1.msra.mxu0 %v645
    %670 = vmatprep.subr.mxu0 0.0
    %671 = vmatpush1.msra.mxu0 %v646
    %672 = vmatprep.subr.mxu0 0.0
    %673 = vmatpush1.msra.mxu0 %v647
    %674 = vmatprep.subr.mxu0 0.0
    %675 = vmatpush1.msra.mxu0 %v648
    %676 = vmatprep.subr.mxu0 0.0
    %677 = vmatpush1.msra.mxu0 %v649
    %678 = vmatprep.subr.mxu0 0.0
    %679 = vmatpush1.msra.mxu0 %v650
    %680 = vmatprep.subr.mxu0 0.0
    %681 = vmatpush1.msra.mxu0 %v651
    %682 = vmatprep.subr.mxu0 0.0
    %683 = vmatpush1.msra.mxu0 %v652
    %684 = vmatprep.subr.mxu0 0.0
    %685 = vmatpush1.msra.mxu0 %v653
    %686 = vmatprep.subr.mxu0 0.0
    %687 = vmatpush1.msra.mxu0 0.0
    %688 = vmatprep.subr.mxu0 0.0
    %689 = vmatpush1.msra.mxu0 0.0
    %690 = vmatprep.subr.mxu0 0.0
    %691 = vmatpush1.msra.mxu0 0.0
    %692 = vmatprep.subr.mxu0 0.0
    %693 = vmatpush1.msra.mxu0 0.0
    %694 = vmatprep.subr.mxu0 0.0
    %695 = vmatpush1.msra.mxu0 0.0
    %696 = vmatprep.subr.mxu0 0.0
    %697 = vmatpush1.msra.mxu0 0.0
    %698 = vmatprep.subr.mxu0 0.0
    %699 = vmatpush1.msra.mxu0 0.0
    %700 = vmatprep.subr.mxu0 0.0
    %701 = vmatpush1.msra.mxu0 0.0
    %702 = vmatprep.subr.mxu0 0.0
    %703 = vmatpush1.msra.mxu0 0.0
    %704 = vmatprep.subr.mxu0 0.0
    %705 = vmatpush1.msra.mxu0 0.0
    %706 = vmatprep.subr.mxu0 0.0
    %707 = vmatpush1.msra.mxu0 0.0
    %708 = vmatprep.subr.mxu0 0.0
    %709 = vmatpush1.msra.mxu0 0.0
    %710 = vmatprep.subr.mxu0 0.0
    %711 = vmatpush1.msra.mxu0 0.0
    %712 = vmatprep.subr.mxu0 0.0
    %713 = vmatpush1.msra.mxu0 0.0
    %714 = vmatprep.subr.mxu0 0.0
    %715 = vmatpush1.msra.mxu0 0.0
    %716 = vmatprep.subr.mxu0 0.0
    %717 = vmatpush1.msra.mxu0 0.0
    %718 = vmatprep.mubr.f32.mxu0 0.0
    %719 = vmatmul.mubr.f32.gmra.mrb[0].mxu0 %v379
    %v720 = vpop.f32.mrb[0].mxu0
    %v721 = vadd.f32 0.0, %v720
    %v722 = vpop.f32.mrb[0].mxu0
    %723 = vdwg.mxu0
    %v724 = vld [vmem:[%s10] sm:$0xf]
    %v726 = vlaneseq
    %v727 = vshrl.u32 %v726, 7
    %v728 = vsub.s32 0, %v727
    %v729 = vrot.slane %v724, %v728
    %v730 = vlaneseq
    %v731 = vshrl.u32 %v730, 7
    %v732 = vsub.s32 1, %v731
    %v733 = vrot.slane %v724, %v732
    %v734 = vlaneseq
    %v735 = vshrl.u32 %v734, 7
    %v736 = vsub.s32 2, %v735
    %v737 = vrot.slane %v724, %v736
    %v738 = vlaneseq
    %v739 = vshrl.u32 %v738, 7
    %v740 = vsub.s32 3, %v739
    %v741 = vrot.slane %v724, %v740
    %v746 = vadd.f32 %v463, %v729
    %v747 = vadd.f32 %v549, %v733
    %v748 = vadd.f32 %v635, %v737
    %v749 = vadd.f32 %v721, %v741
    %750 = vst [vmem:[#allocation16] sm:$0xff] %v746
    %751 = vst [vmem:[#allocation16 + $0x8] sm:$0xff] %v747
    %752 = vst [vmem:[#allocation16 + $0x10] sm:$0xff] %v748
    %753 = vst [vmem:[#allocation16 + $0x18] sm:$0xff] %v749
    // Predicated region
    $region78: #{tpu_custom_call.1} parent=1 // pred_check
      _
    $region79: #{tpu_custom_call.1} parent=1 // pred_check_branch
      %755 = sbr.rel (0) target = $region81
    $region80: #{tpu_custom_call.1} parent=1 // pred_region
      %s757 = ssub.s32 512, 512
      %758 = vsyncadd [#allocation4], %s757
      %s760 = sshll.u32 [#allocation16], 4
      %s761 = int_to_ptr.vmem [resolvable:$true] %s760
      %763 = dma.vmem_to_hbm [thread:$0]  %s761, 512, %s11, [#allocation4]
    $region81: #{tpu_custom_call.1} parent=1 // pred_fallthru
      _
    // Predicated region
    $region82: #{tpu_custom_call.1} parent=1 // pred_check
      _
    $region83: #{tpu_custom_call.1} parent=1 // pred_check_branch
      %765 = sbr.rel (0) target = $region85
    $region84: #{tpu_custom_call.1} parent=1 // pred_region
      %766 = dma.done [#allocation4], 512
    $region85: #{tpu_custom_call.1} parent=1 // pred_fallthru
      _
    %767 = vsyncpa [#allocation3], 1
    %768 = vsyncpa [#allocation6], 1
    %769 = vsyncpa [#allocation9], 1
    %770 = vsyncpa [#allocation12], 1
    %771 = vsyncpa [#allocation15], 1
    %772 = vsyncpa [#allocation4], 1

</llo_original>
